<compile_context>
chip_gen: v7x
topology: tpu7x:2x2x1
jax: 0.10.0
libtpu: 0.0.40
codegen_flags: <defaults>
</compile_context>

<pallas_src>
import jax
import jax.numpy as jnp
from jax.experimental import pallas as pl
from jax.experimental.pallas import tpu as pltpu


LANE = 128
SUBLANE = 8
# Below this many weight elements, XLA's fused dot beats any Pallas launch overhead.
SMALL_WEIGHT_ELEMS = 512 * 1024


def _round_up(x, m):
    return ((x + m - 1) // m) * m


def _cdiv(a, b):
    return -(-a // b)


def _vmem_budget():
    """Generation-aware (tile budget, scoped vmem limit), in bytes."""
    vmem = 0
    try:
        info = pltpu.get_tpu_info()
        vmem = getattr(info, "vmem_capacity_bytes", None) or \
               getattr(info, "vmem_size_bytes", 0) or 0
    except Exception:
        vmem = 0
    if vmem >= 100 * 1024 * 1024:            # v5e / v6e: 128 MiB physical VMEM
        return 48 * 1024 * 1024, 64 * 1024 * 1024
    # v7x (64 MiB physical) or unknown part: keep the portable ceiling.
    return 24 * 1024 * 1024, 32 * 1024 * 1024


# ----------------------------- kernel bodies -----------------------------

def _conv1x1_kernel(x_ref, w_ref, b_ref, o_ref):
    # x:(tm,K) @ w:(K,tn) + bias:(1,tn); f32 accumulate + f32 bias, cast on store.
    acc = jnp.dot(x_ref[...], w_ref[...], preferred_element_type=jnp.float32)
    o_ref[...] = (acc + b_ref[...]).astype(o_ref.dtype)


def _conv1x1_kernel_ktiled(x_ref, w_ref, b_ref, o_ref, acc_ref):
    # Same math with a C_in reduction grid axis (axis 2, innermost).
    k = pl.program_id(2)

    @pl.when(k == 0)
    def _init():
        acc_ref[...] = jnp.zeros_like(acc_ref)

    acc_ref[...] += jnp.dot(x_ref[...], w_ref[...],
                            preferred_element_type=jnp.float32)

    @pl.when(k == pl.num_programs(2) - 1)
    def _finalize():
        o_ref[...] = (acc_ref[...] + b_ref[...]).astype(o_ref.dtype)


# --------------------------- parameter prep (one-time) ---------------------------

def prepare_conv1d_patch_map_params(weight, bias, *, compute_dtype=None):
    """One-time parameter prep, hoisted out of the per-call hot path.

    weight : (C_out, C_in)  nn.Conv1d weight with the kernel dim squeezed
    bias   : (C_out,)
    compute_dtype : optional (e.g. jnp.bfloat16) dtype for the *streamed* weight;
                    accumulation and the bias add stay f32.
    Returns (w_t, bias_row): W^T zero-padded to lane-dense (C_in_p, C_out_p), and
    an f32 (1, C_out_p) bias row.
    """
    c_out, c_in = weight.shape
    c_in_p = _round_up(c_in, LANE)
    c_out_p = _round_up(c_out, LANE)
    w_t = weight.T                                     # (C_in, C_out): lane-dense C_out
    if compute_dtype is not None:
        w_t = w_t.astype(compute_dtype)
    if (c_in_p, c_out_p) != (c_in, c_out):
        w_t = jnp.pad(w_t, ((0, c_in_p - c_in), (0, c_out_p - c_out)))
    b_row = bias.astype(jnp.float32).reshape(1, c_out)
    if c_out_p != c_out:
        b_row = jnp.pad(b_row, ((0, 0), (0, c_out_p - c_out)))
    return w_t, b_row


# ------------------------------- tile selection -------------------------------

def _select_tiles(batch, c_in_p, c_out_p, in_bytes, out_bytes, sub, budget,
                  tm_req, tn_req, tk_req):
    def fp(tm_, tn_, tk_):
        f = 2 * (tm_ * tk_ * in_bytes + tk_ * tn_ * in_bytes + tn_ * 4
                 + tm_ * tn_ * out_bytes)
        if tk_ < c_in_p:                       # f32 accumulator scratch when K-tiled
            f += tm_ * tn_ * 4
        return f

    # K tile: exact divisor of padded C_in (multiple of 128) so W^T needs no re-pad.
    k_divs = [d for d in range(LANE, c_in_p + 1, LANE) if c_in_p % d == 0]
    if tk_req is not None:
        assert tk_req % LANE == 0 and c_in_p % tk_req == 0, "tk must divide padded C_in"
        tk = tk_req
    else:
        tk = c_in_p if c_in_p <= 2048 else max(d for d in k_divs if d <= 1024)

    # Baseline batch tile: balanced around a 256-row cap, sublane aligned.
    cap = tm_req if tm_req is not None else 256
    parts0 = max(1, _cdiv(batch, max(sub, cap)))
    tm_base = _round_up(_cdiv(batch, parts0), sub)

    # C_out tile: largest exact divisor of padded C_out (<= cap) fitting the budget;
    # shrink K (keep tn lane-dense and >= 128) before crushing tn.
    tn_cap = min(tn_req if tn_req is not None else 2048, c_out_p)
    tn_divs = sorted((d for d in range(LANE, c_out_p + 1, LANE)
                      if c_out_p % d == 0 and d <= max(tn_cap, LANE)), reverse=True)
    tn = None
    while tn is None:
        for cand in tn_divs:
            if fp(tm_base, cand, tk) <= budget:
                tn = cand
                break
        if tn is None:
            smaller_k = [d for d in k_divs if d < tk]
            if tk_req is None and smaller_k:
                tk = max(smaller_k)
            else:
                tn = LANE
                break

    # Batch tile: GROW toward full residency (grid_m == 1) before adding batch tiles.
    batch_full = _round_up(batch, sub)
    per_row = 2 * (tk * in_bytes + tn * out_bytes) + (tn * 4 if tk < c_in_p else 0)
    fixed = 2 * (tk * tn * in_bytes + tn * 4)
    tm_fit = max(sub, ((budget - fixed) // per_row) // sub * sub)
    if tm_req is not None:
        tm_fit = min(tm_fit, max(sub, _round_up(tm_req, sub)))
    if tm_fit >= batch_full:
        tm = batch_full
    else:
        parts = _cdiv(batch, tm_fit)
        tm = _round_up(_cdiv(batch, parts), sub)     # balanced, <= tm_fit

    assert fp(tm, tn, tk) <= budget, (
        "Conv1dPatchMap: selected tiles exceed the VMEM budget "
        f"(tm={tm}, tn={tn}, tk={tk}, budget={budget})")
    return tm, tn, tk


# ------------------------------- main entry point -------------------------------

def conv1d_patch_map(x, w_t, bias_row, *, dim, prediction_length, input_size,
                     tm=None, tn=None, tk=None, use_pallas=None):
    """y[b, o] = sum_i W[o, i] * x[b, i] + bias[o], reshaped to
    (B, dim, prediction_length, input_size).

    w_t / bias_row come from prepare_conv1d_patch_map_params (W^T, padded, optionally
    bf16) so no weight transpose/cast/pad happens in the hot path.  Accumulation and
    the bias add are always f32."""
    out_dtype = x.dtype
    batch = x.shape[0]
    x_flat = x.reshape(batch, -1)                      # (B, C_in)
    c_in = x_flat.shape[1]
    c_out = dim * prediction_length * input_size
    c_in_p, c_out_p = w_t.shape
    assert c_in <= c_in_p and c_out <= c_out_p, "params not prepared for this input"

    in_dtype = w_t.dtype
    if x_flat.dtype != in_dtype:
        x_flat = x_flat.astype(in_dtype)
    in_bytes = jnp.dtype(in_dtype).itemsize
    out_bytes = jnp.dtype(out_dtype).itemsize

    # ---- small-problem fast path: launch + pipeline overhead dwarfs the math ----
    if use_pallas is None:
        use_pallas = (c_in_p * c_out_p) >= SMALL_WEIGHT_ELEMS
    if not use_pallas:
        xp = x_flat if c_in == c_in_p else jnp.pad(x_flat, ((0, 0), (0, c_in_p - c_in)))
        y = jnp.dot(xp, w_t, preferred_element_type=jnp.float32) + bias_row
        return y[:, :c_out].astype(out_dtype).reshape(
            batch, dim, prediction_length, input_size)

    budget, vmem_limit = _vmem_budget()
    sub = SUBLANE * (4 // in_bytes) if in_bytes < 4 else SUBLANE   # bf16 packs 16 rows
    tm, tn, tk = _select_tiles(batch, c_in_p, c_out_p, in_bytes, out_bytes, sub,
                               budget, tm, tn, tk)

    batch_p = _round_up(batch, tm)
    grid_m = batch_p // tm
    grid_n = c_out_p // tn
    grid_k = c_in_p // tk
    ktiled = grid_k > 1

    # x padding (rows to the batch tile, cols to lane-dense C_in).  Zero pad is exact.
    if batch_p != batch or c_in_p != c_in:
        x_flat = jnp.pad(x_flat, ((0, batch_p - batch), (0, c_in_p - c_in)))

    # Streaming orientation: the operand indexed only by the OUTER axis is fetched once
    # (held resident across inner steps); re-streamed bytes = B*K*N / (resident tile).
    # Full residency of either operand (grid == 1 on its axis) means both stream once.
    if grid_m == 1:
        swap = False              # weight-resident (original weight-streaming GEMV)
    elif grid_n == 1:
        swap = True               # x-resident; weight fully resident anyway
    else:
        swap = tm > tn            # keep the larger outer tile resident

    if not swap:
        grid = (grid_n, grid_m) + ((grid_k,) if ktiled else ())
        if ktiled:
            x_map = lambda j, i, k: (i, k)
            w_map = lambda j, i, k: (k, j)
            b_map = lambda j, i, k: (0, j)
            o_map = lambda j, i, k: (i, j)
        else:
            x_map = lambda j, i: (i, 0)
            w_map = lambda j, i: (0, j)
            b_map = lambda j, i: (0, j)
            o_map = lambda j, i: (i, j)
        outer = grid_n
    else:
        grid = (grid_m, grid_n) + ((grid_k,) if ktiled else ())
        if ktiled:
            x_map = lambda i, j, k: (i, k)
            w_map = lambda i, j, k: (k, j)
            b_map = lambda i, j, k: (0, j)
            o_map = lambda i, j, k: (i, j)
        else:
            x_map = lambda i, j: (i, 0)
            w_map = lambda i, j: (0, j)
            b_map = lambda i, j: (0, j)
            o_map = lambda i, j: (i, j)
        outer = grid_m

    # Megacore (v7x, 2 TCs): force the split onto the outer axis (tiles the resident,
    # larger operand -> each core streams half of it).  "arbitrary" on the inner axis
    # is a no-op on single-TC v5e/v6e.  Reduction axis (if any) is last + arbitrary.
    dims = ("parallel", "arbitrary" if outer > 1 else "parallel")
    if ktiled:
        dims = dims + ("arbitrary",)

    kernel = _conv1x1_kernel_ktiled if ktiled else _conv1x1_kernel
    scratch = [pltpu.VMEM((tm, tn), jnp.float32)] if ktiled else []

    # Advisory cost estimate, including grid re-reads of the streamed operand.
    if not swap:
        x_factor = grid_n if ((grid_m > 1 or grid_k > 1) and grid_n > 1) else 1
        w_factor = grid_m if (ktiled and grid_m > 1) else 1
    else:
        w_factor = grid_m if ((grid_n > 1 or grid_k > 1) and grid_m > 1) else 1
        x_factor = grid_n if (ktiled and grid_n > 1) else 1
    cost = pl.CostEstimate(
        flops=2 * batch_p * c_in_p * c_out_p,
        transcendentals=0,
        bytes_accessed=(x_flat.size * in_bytes * x_factor
                        + w_t.size * in_bytes * w_factor
                        + bias_row.size * 4
                        + batch_p * c_out_p * out_bytes),
    )

    out = pl.pallas_call(
        kernel,
        out_shape=jax.ShapeDtypeStruct((batch_p, c_out_p), out_dtype),
        grid_spec=pltpu.PrefetchScalarGridSpec(
            num_scalar_prefetch=0,
            grid=grid,
            in_specs=[
                pl.BlockSpec((tm, tk), x_map),     # x tile (lane-dense C_in)
                pl.BlockSpec((tk, tn), w_map),     # W^T tile (lane-dense C_out)
                pl.BlockSpec((1, tn), b_map),      # f32 bias strip
            ],
            out_specs=pl.BlockSpec((tm, tn), o_map),
            scratch_shapes=scratch,
        ),
        compiler_params=pltpu.CompilerParams(
            dimension_semantics=dims,
            vmem_limit_bytes=vmem_limit,
        ),
        cost_estimate=cost,
    )(x_flat, w_t, bias_row)

    out = out[:batch, :c_out]
    return out.reshape(batch, dim, prediction_length, input_size)


def conv1d_patch_map_from_weights(x, weight, bias, *, dim, prediction_length,
                                  input_size, compute_dtype=None, **kw):
    """Drop-in wrapper taking the PyTorch Conv1d layout.  For hot loops, call
    prepare_conv1d_patch_map_params ONCE and reuse: the transpose/cast/pad here
    re-streams the weight through HBM on every call."""
    w_t, b_row = prepare_conv1d_patch_map_params(weight, bias,
                                                 compute_dtype=compute_dtype)
    return conv1d_patch_map(x, w_t, b_row, dim=dim,
                            prediction_length=prediction_length,
                            input_size=input_size, **kw)


# ------------------------------------ tests ------------------------------------

if __name__ == "__main__":
    key = jax.random.PRNGKey(0)

    # ---- Config 1: module's own small sizes (B=2, C_in=64, C_out=128) ----
    dim, patch_size = 8, (2, 2)
    context_length, prediction_length, input_size = 8, 4, 4
    p1 = context_length // patch_size[0]           # 4
    p2 = input_size // patch_size[1]                # 2
    c_in = p1 * p2 * dim                            # 64
    c_out = dim * prediction_length * input_size    # 128
    batch = 2

    k_x, k_w, k_b = jax.random.split(key, 3)
    weight = jax.random.normal(k_w, (c_out, c_in), dtype=jnp.float32) * 0.02
    bias = jax.random.normal(k_b, (c_out,), dtype=jnp.float32) * 0.02
    x = jax.random.normal(k_x, (batch, p1, p2, dim), dtype=jnp.float32)

    y_ref = (x.reshape(batch, -1) @ weight.T + bias).reshape(
        batch, dim, prediction_length, input_size)

    # Parameters prepared once (transpose/pad hoisted out of the hot path).
    w_t, b_row = prepare_conv1d_patch_map_params(weight, bias)

    # f32 Pallas path (forced; auto-dispatch would take the XLA fast path here).
    y = conv1d_patch_map(x, w_t, b_row, dim=dim, prediction_length=prediction_length,
                         input_size=input_size, use_pallas=True)
    y = jax.block_until_ready(y)
    assert y.shape == (batch, dim, prediction_length, input_size)
    assert jnp.allclose(y, y_ref, atol=1e-5, rtol=1e-5)

    # Small-problem fast path (auto dispatch -> plain fused dot).
    y_fast = jax.block_until_ready(
        conv1d_patch_map(x, w_t, b_row, dim=dim, prediction_length=prediction_length,
                         input_size=input_size))
    assert jnp.allclose(y_fast, y_ref, atol=1e-5, rtol=1e-5)

    # bf16 streaming (opt-in): halved HBM bytes for the weight stream; f32 accumulate.
    w_t_bf, b_row_bf = prepare_conv1d_patch_map_params(
        weight, bias, compute_dtype=jnp.bfloat16)
    y_bf = conv1d_patch_map(x, w_t_bf, b_row_bf, dim=dim,
                            prediction_length=prediction_length,
                            input_size=input_size, use_pallas=True)
    y_bf = jax.block_until_ready(y_bf)
    assert jnp.allclose(y_bf, y_ref, atol=2e-2, rtol=2e-2)

    # ---- Config 2: multi-tile C_out grid, forced K tiling, batch padding ----
    dim2, pred2, insize2, ctx2 = 8, 32, 16, 8
    p1b, p2b = ctx2 // patch_size[0], insize2 // patch_size[1]   # 4, 8
    c_in2 = p1b * p2b * dim2                                     # 256
    c_out2 = dim2 * pred2 * insize2                              # 4096
    batch2 = 37
    k2 = jax.random.split(key, 4)
    w2 = jax.random.normal(k2[0], (c_out2, c_in2), dtype=jnp.float32) * 0.02
    b2 = jax.random.normal(k2[1], (c_out2,), dtype=jnp.float32) * 0.02
    x2 = jax.random.normal(k2[2], (batch2, p1b, p2b, dim2), dtype=jnp.float32)
    y2_ref = (x2.reshape(batch2, -1) @ w2.T + b2).reshape(batch2, dim2, pred2, insize2)

    wt2, br2 = prepare_conv1d_patch_map_params(w2, b2)
    y2 = conv1d_patch_map(x2, wt2, br2, dim=dim2, prediction_length=pred2,
                          input_size=insize2, tn=2048, tk=128, use_pallas=True)
    y2 = jax.block_until_ready(y2)
    assert y2.shape == (batch2, dim2, pred2, insize2)
    assert jnp.allclose(y2, y2_ref, atol=1e-4, rtol=1e-4)

    print("KERNEL_OK")
</pallas_src>

<mosaic_0001>
module attributes {stable_mosaic.version = 11 : i64} {
  func.func @_conv1x1_kernel(%arg0: i32, %arg1: i32, %arg2: memref<8x128xf32, #tpu.memory_space<vmem>>, %arg3: memref<128x128xf32, #tpu.memory_space<vmem>>, %arg4: memref<1x128xf32, #tpu.memory_space<vmem>>, %arg5: memref<8x128xf32, #tpu.memory_space<vmem>>) attributes {dimension_semantics = [#tpu.dimension_semantics<parallel>, #tpu.dimension_semantics<parallel>], iteration_bounds = array<i64: 1, 1>, scalar_prefetch = 0 : i64, scratch_operands = 0 : i64, tpu.core_type = #tpu.core_type<tc>, window_params = [{transform_indices = @transform_0, window_bounds = array<i64: 8, 128>}, {transform_indices = @transform_1, window_bounds = array<i64: 128, 128>}, {transform_indices = @transform_2, window_bounds = array<i64: 1, 128>}, {transform_indices = @transform_3, window_bounds = array<i64: 8, 128>}]} {
    %c0 = arith.constant 0 : index
    %c0_0 = arith.constant 0 : index
    %0 = vector.load %arg2[%c0, %c0_0] : memref<8x128xf32, #tpu.memory_space<vmem>>, vector<8x128xf32>
    %c0_1 = arith.constant 0 : index
    %c0_2 = arith.constant 0 : index
    %1 = vector.load %arg3[%c0_1, %c0_2] : memref<128x128xf32, #tpu.memory_space<vmem>>, vector<128x128xf32>
    %cst = arith.constant dense<0.000000e+00> : vector<8x128xf32>
    %2 = tpu.matmul %0, %1, %cst {dimension_numbers = #tpu.dot_dimension_numbers<[1], [0], [0], [1], [0, 0, 1, 1], [], []>} : vector<8x128xf32>, vector<128x128xf32>, vector<8x128xf32> -> vector<8x128xf32>
    %c0_3 = arith.constant 0 : index
    %c0_4 = arith.constant 0 : index
    %3 = vector.load %arg4[%c0_3, %c0_4] : memref<1x128xf32, #tpu.memory_space<vmem>>, vector<1x128xf32>
    %4 = vector.broadcast %3 : vector<1x128xf32> to vector<8x128xf32>
    %5 = arith.addf %2, %4 : vector<8x128xf32>
    %c0_5 = arith.constant 0 : index
    %c0_6 = arith.constant 0 : index
    %6 = vector.load %arg5[%c0_5, %c0_6] : memref<8x128xf32, #tpu.memory_space<vmem>>, vector<8x128xf32>
    tpu.vector_store %arg5[%c0_5, %c0_6], %5 {strides = array<i32>} : memref<8x128xf32, #tpu.memory_space<vmem>>, vector<8x128xf32>,
    return
  }
  func.func @transform_0(%arg0: i32, %arg1: i32) -> (i32, i32) {
    %c0_i32 = arith.constant 0 : i32
    %c0_i32_0 = arith.constant 0 : i32
    return %arg1, %c0_i32 : i32, i32
  }
  func.func @transform_1(%arg0: i32, %arg1: i32) -> (i32, i32) {
    %c0_i32 = arith.constant 0 : i32
    %c0_i32_0 = arith.constant 0 : i32
    return %c0_i32, %arg0 : i32, i32
  }
  func.func @transform_2(%arg0: i32, %arg1: i32) -> (i32, i32) {
    %c0_i32 = arith.constant 0 : i32
    %c0_i32_0 = arith.constant 0 : i32
    return %c0_i32, %arg0 : i32, i32
  }
  func.func @transform_3(%arg0: i32, %arg1: i32) -> (i32, i32) {
    %c0_i32 = arith.constant 0 : i32
    return %arg1, %arg0 : i32, i32
  }
}

</mosaic_0001>

<llo_original>
// kernel: tpu_custom_call.1
$region0: #{tpu_custom_call.1}
  #allocation0 [shape = 'u32[]', space=smem, size = 0x4, offset = 0x4, fixed_abs, tag = 'smem constant byte address 0x4 - core index']
  #allocation1 [shape = 'u32[144,128]{1,0:T(1,128)}', space=vmem, size = 0x12000, scoped, tag = 'internal scratch']
  %s0 = inlined_call_operand.hbm [shape: f32[8,128], index: 0, kind: input, shape index: {}]
  %s1 = inlined_call_operand.hbm [shape: f32[128,128], index: 1, kind: input, shape index: {}]
  %s2 = inlined_call_operand.vmem [shape: f32[1,128], index: 2, kind: input, shape index: {}]
  %s3 = inlined_call_operand.hbm [shape: f32[8,128], index: 3, kind: output, shape index: {}]
  %s4 = sld [smem:[#allocation0]]
  $region30: #{tpu_custom_call.1} parent=0
    _
  %s6 = ssub.s32 1, %s4
  %s7 = scalar_select 0, %s6, %s4
  $region1: #{tpu_custom_call.1} parent=0
    #allocation2 [shape = 'u8[4096]{0}', space=vmem, size = 0x1000, scoped, tag = 'input window, operand 0, single buffered']
    #allocation3 [shape = 's32[1]{0}', space=sflag, size = 0x4, scoped, tag = 'scoped memory for tpu_custom_call.1']
    #allocation4 [shape = 's32[1]{0}', space=sflag, size = 0x4, scoped, tag = 'scoped memory for tpu_custom_call.1']
    #allocation5 [shape = 'u8[65536]{0}', space=vmem, size = 0x10000, scoped, tag = 'input window, operand 1, single buffered']
    #allocation6 [shape = 's32[1]{0}', space=sflag, size = 0x4, scoped, tag = 'scoped memory for tpu_custom_call.1']
    #allocation7 [shape = 'u8[4096]{0}', space=vmem, size = 0x1000, scoped, tag = 'output window, operand 0, single buffered']
    %8 = vsyncpa [#allocation3], 0
    %9 = vsyncpa [#allocation6], 0
    %10 = vsyncpa [#allocation4], 0
    // Predicated region
    $region2: #{tpu_custom_call.1} parent=1 // pred_check
      _
    $region3: #{tpu_custom_call.1} parent=1 // pred_check_branch
      %12 = sbr.rel (0) target = $region5
    $region4: #{tpu_custom_call.1} parent=1 // pred_region
      %s14 = ssub.s32 128, 128
      %15 = vsyncadd [#allocation3], %s14
      %s17 = sshll.u32 [#allocation2], 4
      %s18 = int_to_ptr.vmem [resolvable:$true] %s17
      %20 = dma.hbm_to_vmem [thread:$0]  %s0, 128, %s18, [#allocation3]
    $region5: #{tpu_custom_call.1} parent=1 // pred_fallthru
      _
    // Predicated region
    $region6: #{tpu_custom_call.1} parent=1 // pred_check
      _
    $region7: #{tpu_custom_call.1} parent=1 // pred_check_branch
      %22 = sbr.rel (0) target = $region9
    $region8: #{tpu_custom_call.1} parent=1 // pred_region
      %s24 = ssub.s32 2048, 2048
      %25 = vsyncadd [#allocation6], %s24
      %s26 = sshll.u32 [#allocation5], 4
      %s27 = int_to_ptr.vmem [resolvable:$true] %s26
      %32 = dma.hbm_to_vmem [thread:$0]  %s1, 2048, %s27, [#allocation6], 128, 128, 8
    $region9: #{tpu_custom_call.1} parent=1 // pred_fallthru
      _
    // Predicated region
    $region10: #{tpu_custom_call.1} parent=1 // pred_check
      _
    $region11: #{tpu_custom_call.1} parent=1 // pred_check_branch
      %34 = sbr.rel (0) target = $region13
    $region12: #{tpu_custom_call.1} parent=1 // pred_region
      _
    $region13: #{tpu_custom_call.1} parent=1 // pred_fallthru
      _
    // Predicated region
    $region14: #{tpu_custom_call.1} parent=1 // pred_check
      _
    $region15: #{tpu_custom_call.1} parent=1 // pred_check_branch
      %36 = sbr.rel (0) target = $region17
    $region16: #{tpu_custom_call.1} parent=1 // pred_region
      %37 = dma.done [#allocation3], 128
    $region17: #{tpu_custom_call.1} parent=1 // pred_fallthru
      _
    // Predicated region
    $region18: #{tpu_custom_call.1} parent=1 // pred_check
      _
    $region19: #{tpu_custom_call.1} parent=1 // pred_check_branch
      %39 = sbr.rel (0) target = $region21
    $region20: #{tpu_custom_call.1} parent=1 // pred_region
      %40 = dma.done [#allocation6], 2048
    $region21: #{tpu_custom_call.1} parent=1 // pred_fallthru
      _
    %v41 = vld [vmem:[#allocation2] sm:$0xff]
    %v42 = vld [vmem:[#allocation5] sm:$0xff]
    %v43 = vld [vmem:[#allocation5 + $0x8] sm:$0xff]
    %v44 = vld [vmem:[#allocation5 + $0x10] sm:$0xff]
    %v45 = vld [vmem:[#allocation5 + $0x18] sm:$0xff]
    %v46 = vld [vmem:[#allocation5 + $0x20] sm:$0xff]
    %v47 = vld [vmem:[#allocation5 + $0x28] sm:$0xff]
    %v48 = vld [vmem:[#allocation5 + $0x30] sm:$0xff]
    %v49 = vld [vmem:[#allocation5 + $0x38] sm:$0xff]
    %v50 = vld [vmem:[#allocation5 + $0x40] sm:$0xff]
    %v51 = vld [vmem:[#allocation5 + $0x48] sm:$0xff]
    %v52 = vld [vmem:[#allocation5 + $0x50] sm:$0xff]
    %v53 = vld [vmem:[#allocation5 + $0x58] sm:$0xff]
    %v54 = vld [vmem:[#allocation5 + $0x60] sm:$0xff]
    %v55 = vld [vmem:[#allocation5 + $0x68] sm:$0xff]
    %v56 = vld [vmem:[#allocation5 + $0x70] sm:$0xff]
    %v57 = vld [vmem:[#allocation5 + $0x78] sm:$0xff]
    %v58 = vld [vmem:[%s2] sm:$0x1]
    %v60 = vlaneseq
    %v61 = vshrl.u32 %v60, 7
    %v62 = vsub.s32 0, %v61
    %v63 = vrot.slane %v58, %v62
    %65 = vmatprep.subr.mxu0 0.0
    %66 = vmatpush1.msra.mxu0 %v42
    %67 = vmatprep.subr.mxu0 0.0
    %68 = vmatpush1.msra.mxu0 %v43
    %69 = vmatprep.subr.mxu0 0.0
    %70 = vmatpush1.msra.mxu0 %v44
    %71 = vmatprep.subr.mxu0 0.0
    %72 = vmatpush1.msra.mxu0 %v45
    %73 = vmatprep.subr.mxu0 0.0
    %74 = vmatpush1.msra.mxu0 %v46
    %75 = vmatprep.subr.mxu0 0.0
    %76 = vmatpush1.msra.mxu0 %v47
    %77 = vmatprep.subr.mxu0 0.0
    %78 = vmatpush1.msra.mxu0 %v48
    %79 = vmatprep.subr.mxu0 0.0
    %80 = vmatpush1.msra.mxu0 %v49
    %81 = vmatprep.subr.mxu0 0.0
    %82 = vmatpush1.msra.mxu0 %v50
    %83 = vmatprep.subr.mxu0 0.0
    %84 = vmatpush1.msra.mxu0 %v51
    %85 = vmatprep.subr.mxu0 0.0
    %86 = vmatpush1.msra.mxu0 %v52
    %87 = vmatprep.subr.mxu0 0.0
    %88 = vmatpush1.msra.mxu0 %v53
    %89 = vmatprep.subr.mxu0 0.0
    %90 = vmatpush1.msra.mxu0 %v54
    %91 = vmatprep.subr.mxu0 0.0
    %92 = vmatpush1.msra.mxu0 %v55
    %93 = vmatprep.subr.mxu0 0.0
    %94 = vmatpush1.msra.mxu0 %v56
    %95 = vmatprep.subr.mxu0 0.0
    %96 = vmatpush1.msra.mxu0 %v57
    %97 = vmatprep.subr.mxu0 0.0
    %98 = vmatpush1.msra.mxu0 0.0
    %99 = vmatprep.subr.mxu0 0.0
    %100 = vmatpush1.msra.mxu0 0.0
    %101 = vmatprep.subr.mxu0 0.0
    %102 = vmatpush1.msra.mxu0 0.0
    %103 = vmatprep.subr.mxu0 0.0
    %104 = vmatpush1.msra.mxu0 0.0
    %105 = vmatprep.subr.mxu0 0.0
    %106 = vmatpush1.msra.mxu0 0.0
    %107 = vmatprep.subr.mxu0 0.0
    %108 = vmatpush1.msra.mxu0 0.0
    %109 = vmatprep.subr.mxu0 0.0
    %110 = vmatpush1.msra.mxu0 0.0
    %111 = vmatprep.subr.mxu0 0.0
    %112 = vmatpush1.msra.mxu0 0.0
    %113 = vmatprep.subr.mxu0 0.0
    %114 = vmatpush1.msra.mxu0 0.0
    %115 = vmatprep.subr.mxu0 0.0
    %116 = vmatpush1.msra.mxu0 0.0
    %117 = vmatprep.subr.mxu0 0.0
    %118 = vmatpush1.msra.mxu0 0.0
    %119 = vmatprep.subr.mxu0 0.0
    %120 = vmatpush1.msra.mxu0 0.0
    %121 = vmatprep.subr.mxu0 0.0
    %122 = vmatpush1.msra.mxu0 0.0
    %123 = vmatprep.subr.mxu0 0.0
    %124 = vmatpush1.msra.mxu0 0.0
    %125 = vmatprep.subr.mxu0 0.0
    %126 = vmatpush1.msra.mxu0 0.0
    %127 = vmatprep.subr.mxu0 0.0
    %128 = vmatpush1.msra.mxu0 0.0
    %129 = vmatprep.mubr.f32.mxu0 0.0
    %130 = vmatmul.mubr.f32.gmra.mrb[0].mxu0 %v41
    %v131 = vpop.f32.mrb[0].mxu0
    %v132 = vadd.f32 %v63, %v131
    %v133 = vpop.f32.mrb[0].mxu0
    %134 = vdwg.mxu0
    %135 = vst [vmem:[#allocation7] sm:$0xff] %v132
    // Predicated region
    $region22: #{tpu_custom_call.1} parent=1 // pred_check
      _
    $region23: #{tpu_custom_call.1} parent=1 // pred_check_branch
      %137 = sbr.rel (0) target = $region25
    $region24: #{tpu_custom_call.1} parent=1 // pred_region
      %s139 = ssub.s32 128, 128
      %140 = vsyncadd [#allocation4], %s139
      %s142 = sshll.u32 [#allocation7], 4
      %s143 = int_to_ptr.vmem [resolvable:$true] %s142
      %145 = dma.vmem_to_hbm [thread:$0]  %s143, 128, %s3, [#allocation4]
    $region25: #{tpu_custom_call.1} parent=1 // pred_fallthru
      _
    // Predicated region
    $region26: #{tpu_custom_call.1} parent=1 // pred_check
      _
    $region27: #{tpu_custom_call.1} parent=1 // pred_check_branch
      %147 = sbr.rel (0) target = $region29
    $region28: #{tpu_custom_call.1} parent=1 // pred_region
      %148 = dma.done [#allocation4], 128
    $region29: #{tpu_custom_call.1} parent=1 // pred_fallthru
      _
    %149 = vsyncpa [#allocation3], 1
    %150 = vsyncpa [#allocation6], 1
    %151 = vsyncpa [#allocation4], 1

</llo_original>
